<compile_context>
chip_gen: v6e
topology: v6e:2x2x1
jax: 0.10.0
libtpu: 0.0.40
codegen_flags: <defaults>
</compile_context>

<pallas_src>
import functools

import jax
import jax.numpy as jnp
from jax.experimental import pallas as pl
from jax.experimental.pallas import tpu as pltpu


def _avg_pool_kernel(x_ref, pw_ref, o_ref, *, kernel_size, stride, out_h):
    """Fused average pooling for one tile of fused (N*C) rows.

    x_ref:  (TR, Hp, Wp)       padded input planes (one image plane per row)
    pw_ref: (Wp, out_w)        W-direction pooling matrix (1/(k*k) folded in)
    o_ref:  (TR*out_h, out_w)  pooled output rows
    """
    k, s = kernel_size, stride
    tr, _, wp = x_ref.shape

    # H-direction pooling: sum of k statically-offset slices (VPU adds).
    hsum = None
    for ki in range(k):
        sl = pl.ds(ki, out_h) if s == 1 else pl.ds(ki, out_h, s)
        part = x_ref[:, sl, :].astype(jnp.float32)
        hsum = part if hsum is None else hsum + part

    # W-direction pooling: dense contraction over the lane dim.
    hsum2d = hsum.reshape(tr * out_h, wp)
    out = jnp.dot(hsum2d, pw_ref[...], preferred_element_type=jnp.float32)
    o_ref[...] = out.astype(o_ref.dtype)


def my_avg_pool(x, kernel_size, stride=1, padding=0):
    N, C, H, W = x.shape
    k, s, p = kernel_size, stride, padding

    if p > 0:
        x = jnp.pad(x, ((0, 0), (0, 0), (p, p), (p, p)))
    Hp, Wp = H + 2 * p, W + 2 * p
    out_h = (Hp - k) // s + 1
    out_w = (Wp - k) // s + 1

    # Same consistency requirement the torch module's .view() imposes.
    assert out_h * out_w == (H // k) * (W // k), (
        "unfold output size incompatible with view(N, C, H//k, W//k)")

    R = N * C
    xr = x.reshape(R, Hp, Wp)  # free row-major view

    # W-pooling matrix: pw[w, ow] = 1/(k*k) iff ow*s <= w < ow*s + k.
    w_idx = jnp.arange(Wp)[:, None]
    ow_idx = jnp.arange(out_w)[None, :]
    pw = (((w_idx >= ow_idx * s) & (w_idx < ow_idx * s + k))
          .astype(jnp.float32)) * (1.0 / (k * k))

    # Row-tile size: keep each input block around <= 4 MiB so double-buffering
    # fits comfortably in scoped VMEM on v5e/v6e/v7x, while large inputs still
    # get many grid steps for pipelining / megacore sharding.
    row_bytes = Hp * Wp * x.dtype.itemsize
    tr = max(1, min(R, (4 * 1024 * 1024) // max(row_bytes, 1)))
    if tr >= 8:
        tr = (tr // 8) * 8
    grid_r = pl.cdiv(R, tr)

    kernel = functools.partial(
        _avg_pool_kernel, kernel_size=k, stride=s, out_h=out_h)

    out = pl.pallas_call(
        kernel,
        out_shape=jax.ShapeDtypeStruct((R * out_h, out_w), x.dtype),
        grid=(grid_r,),
        in_specs=[
            pl.BlockSpec((tr, Hp, Wp), lambda r: (r, 0, 0)),   # input rows
            pl.BlockSpec((Wp, out_w), lambda r: (0, 0)),       # pooling matrix
        ],
        out_specs=pl.BlockSpec((tr * out_h, out_w), lambda r: (r, 0)),
        compiler_params=pltpu.CompilerParams(
            dimension_semantics=("parallel",)),
    )(xr, pw)

    # (R*out_h, out_w) row-major == (N, C, L) row-major, so this reshape is the
    # exact analogue of torch's .view(N, C, H//k, W//k).
    return out.reshape(N, C, H // k, W // k)


if __name__ == "__main__":
    key = jax.random.PRNGKey(0)
    N, C, H, W = 2, 4, 16, 16
    kernel_size, stride, padding = 2, 2, 0

    x = jax.random.normal(key, (N, C, H, W), dtype=jnp.float32)

    y = my_avg_pool(x, kernel_size, stride=stride, padding=padding)
    y = jax.block_until_ready(y)

    # Pure-JAX reference: 2x2 / stride-2 average pooling.
    ref = x.reshape(N, C, H // kernel_size, kernel_size,
                    W // kernel_size, kernel_size).mean(axis=(3, 5))

    assert y.shape == (N, C, H // kernel_size, W // kernel_size)
    assert y.dtype == x.dtype
    assert jnp.allclose(y, ref, atol=1e-5, rtol=1e-5)

    print("KERNEL_OK")
</pallas_src>

<mosaic_0001>
module attributes {stable_mosaic.version = 11 : i64} {
  func.func @_avg_pool_kernel(%arg0: i32, %arg1: memref<8x16x16xf32, #tpu.memory_space<vmem>>, %arg2: memref<16x8xf32, #tpu.memory_space<vmem>>, %arg3: memref<64x8xf32, #tpu.memory_space<vmem>>) attributes {dimension_semantics = [#tpu.dimension_semantics<parallel>], iteration_bounds = array<i64: 1>, scalar_prefetch = 0 : i64, scratch_operands = 0 : i64, tpu.core_type = #tpu.core_type<tc>, window_params = [{transform_indices = @transform_0, window_bounds = array<i64: 8, 16, 16>}, {pipeline_mode = #tpu.pipeline_mode<synchronous>, transform_indices = @transform_1, window_bounds = array<i64: 16, 8>}, {transform_indices = @transform_2, window_bounds = array<i64: 64, 8>}]} {
    %c0 = arith.constant 0 : index
    %c0_0 = arith.constant 0 : index
    %c0_1 = arith.constant 0 : index
    %0 = tpu.strided_load %arg1[%c0, %c0_0, %c0_1] {strides = array<i32: 1, 2, 1>} : memref<8x16x16xf32, #tpu.memory_space<vmem>>, vector<8x8x16xf32>
    %c0_2 = arith.constant 0 : index
    %c1 = arith.constant 1 : index
    %c0_3 = arith.constant 0 : index
    %1 = tpu.strided_load %arg1[%c0_2, %c1, %c0_3] {strides = array<i32: 1, 2, 1>} : memref<8x16x16xf32, #tpu.memory_space<vmem>>, vector<8x8x16xf32>
    %2 = arith.addf %0, %1 : vector<8x8x16xf32>
    %3 = vector.shape_cast %2 : vector<8x8x16xf32> to vector<64x16xf32>
    %c0_4 = arith.constant 0 : index
    %c0_5 = arith.constant 0 : index
    %4 = vector.load %arg2[%c0_4, %c0_5] : memref<16x8xf32, #tpu.memory_space<vmem>>, vector<16x8xf32>
    %cst = arith.constant dense<0.000000e+00> : vector<64x8xf32>
    %5 = tpu.matmul %3, %4, %cst {dimension_numbers = #tpu.dot_dimension_numbers<[1], [0], [0], [1], [0, 0, 1, 1], [], []>} : vector<64x16xf32>, vector<16x8xf32>, vector<64x8xf32> -> vector<64x8xf32>
    %c0_6 = arith.constant 0 : index
    %c0_7 = arith.constant 0 : index
    %6 = vector.load %arg3[%c0_6, %c0_7] : memref<64x8xf32, #tpu.memory_space<vmem>>, vector<64x8xf32>
    tpu.vector_store %arg3[%c0_6, %c0_7], %5 {strides = array<i32>} : memref<64x8xf32, #tpu.memory_space<vmem>>, vector<64x8xf32>,
    return
  }
  func.func @transform_0(%arg0: i32) -> (i32, i32, i32) {
    %c0_i32 = arith.constant 0 : i32
    %c0_i32_0 = arith.constant 0 : i32
    %c0_i32_1 = arith.constant 0 : i32
    return %arg0, %c0_i32, %c0_i32_0 : i32, i32, i32
  }
  func.func @transform_1(%arg0: i32) -> (i32, i32) {
    %c0_i32 = arith.constant 0 : i32
    %c0_i32_0 = arith.constant 0 : i32
    %c0_i32_1 = arith.constant 0 : i32
    return %c0_i32, %c0_i32_0 : i32, i32
  }
  func.func @transform_2(%arg0: i32) -> (i32, i32) {
    %c0_i32 = arith.constant 0 : i32
    %c0_i32_0 = arith.constant 0 : i32
    return %arg0, %c0_i32 : i32, i32
  }
}

</mosaic_0001>

<llo_original>
// kernel: tpu_custom_call.1
$region0: #{tpu_custom_call.1}
  #allocation0 [shape = 'u32[]', space=smem, size = 0x4, offset = 0x4, fixed_abs, tag = 'smem constant byte address 0x4 - core index']
  #allocation1 [shape = 'u32[144,128]{1,0:T(1,128)}', space=vmem, size = 0x12000, scoped, tag = 'internal scratch']
  %s0 = inlined_call_operand.hbm [shape: f32[8,16,16], index: 0, kind: input, shape index: {}]
  %s1 = inlined_call_operand.vmem [shape: f32[16,8], index: 1, kind: input, shape index: {}]
  %s2 = inlined_call_operand.vmem [shape: f32[64,8], index: 2, kind: output, shape index: {}]
  %s3 = sld [smem:[#allocation0]]
  $region22: #{tpu_custom_call.1} parent=0
    _
  %s5 = ssub.s32 1, %s3
  %s6 = scalar_select 0, %s5, %s3
  $region1: #{tpu_custom_call.1} parent=0
    #allocation2 [shape = 'u8[65536]{0}', space=vmem, size = 0x10000, scoped, tag = 'input window, operand 0, single buffered']
    #allocation3 [shape = 's32[1]{0}', space=sflag, size = 0x4, scoped, tag = 'scoped memory for tpu_custom_call.1']
    %7 = vsyncpa [#allocation3], 0
    // Predicated region
    $region2: #{tpu_custom_call.1} parent=1 // pred_check
      _
    $region3: #{tpu_custom_call.1} parent=1 // pred_check_branch
      %9 = sbr.rel (0) target = $region5
    $region4: #{tpu_custom_call.1} parent=1 // pred_region
      %s11 = ssub.s32 2048, 2048
      %12 = vsyncadd [#allocation3], %s11
      %s13 = sshll.u32 [#allocation2], 4
      %s14 = int_to_ptr.vmem [resolvable:$true] %s13
      %19 = dma.hbm_to_vmem [thread:$0]  %s0, 2048, %s14, [#allocation3], 128, 128, 8
    $region5: #{tpu_custom_call.1} parent=1 // pred_fallthru
      _
    // Predicated region
    $region6: #{tpu_custom_call.1} parent=1 // pred_check
      _
    $region7: #{tpu_custom_call.1} parent=1 // pred_check_branch
      %21 = sbr.rel (0) target = $region9
    $region8: #{tpu_custom_call.1} parent=1 // pred_region
      _
    $region9: #{tpu_custom_call.1} parent=1 // pred_fallthru
      _
    // Predicated region
    $region10: #{tpu_custom_call.1} parent=1 // pred_check
      _
    $region11: #{tpu_custom_call.1} parent=1 // pred_check_branch
      %23 = sbr.rel (0) target = $region13
    $region12: #{tpu_custom_call.1} parent=1 // pred_region
      %24 = dma.done [#allocation3], 2048
    $region13: #{tpu_custom_call.1} parent=1 // pred_fallthru
      _
    %v25 = vld [vmem:[#allocation2] ss:$2 sm:$0xff]
    %s26 = scalar_lea.vmem [#allocation2], 16
    %v27 = vld [vmem:[%s26] ss:$2 sm:$0xff]
    %s28 = scalar_lea.vmem [#allocation2], 32
    %v29 = vld [vmem:[%s28] ss:$2 sm:$0xff]
    %s30 = scalar_lea.vmem [#allocation2], 48
    %v31 = vld [vmem:[%s30] ss:$2 sm:$0xff]
    %s32 = scalar_lea.vmem [#allocation2], 64
    %v33 = vld [vmem:[%s32] ss:$2 sm:$0xff]
    %s34 = scalar_lea.vmem [#allocation2], 80
    %v35 = vld [vmem:[%s34] ss:$2 sm:$0xff]
    %s36 = scalar_lea.vmem [#allocation2], 96
    %v37 = vld [vmem:[%s36] ss:$2 sm:$0xff]
    %s38 = scalar_lea.vmem [#allocation2], 112
    %v39 = vld [vmem:[%s38] ss:$2 sm:$0xff]
    %s40 = scalar_lea.vmem [#allocation2], 1
    %v41 = vld [vmem:[%s40] ss:$2 sm:$0xff]
    %s42 = scalar_lea.vmem [#allocation2], 17
    %v43 = vld [vmem:[%s42] ss:$2 sm:$0xff]
    %s44 = scalar_lea.vmem [#allocation2], 33
    %v45 = vld [vmem:[%s44] ss:$2 sm:$0xff]
    %s46 = scalar_lea.vmem [#allocation2], 49
    %v47 = vld [vmem:[%s46] ss:$2 sm:$0xff]
    %s48 = scalar_lea.vmem [#allocation2], 65
    %v49 = vld [vmem:[%s48] ss:$2 sm:$0xff]
    %s50 = scalar_lea.vmem [#allocation2], 81
    %v51 = vld [vmem:[%s50] ss:$2 sm:$0xff]
    %s52 = scalar_lea.vmem [#allocation2], 97
    %v53 = vld [vmem:[%s52] ss:$2 sm:$0xff]
    %s54 = scalar_lea.vmem [#allocation2], 113
    %v55 = vld [vmem:[%s54] ss:$2 sm:$0xff]
    %v56 = vadd.f32 %v25, %v41
    %v57 = vadd.f32 %v27, %v43
    %v58 = vadd.f32 %v29, %v45
    %v59 = vadd.f32 %v31, %v47
    %v60 = vadd.f32 %v33, %v49
    %v61 = vadd.f32 %v35, %v51
    %v62 = vadd.f32 %v37, %v53
    %v63 = vadd.f32 %v39, %v55
    %v64 = vld [vmem:[%s1] sm:$0xff]
    %v65 = vld [vmem:[%s1 + $0x8] sm:$0xff]
    %vm66 = vcmask 130048
    %v68 = vsel %vm66, %v56, 0
    %v71 = vsel %vm66, %v57, 0
    %v74 = vsel %vm66, %v58, 0
    %v77 = vsel %vm66, %v59, 0
    %v80 = vsel %vm66, %v60, 0
    %v83 = vsel %vm66, %v61, 0
    %v86 = vsel %vm66, %v62, 0
    %v89 = vsel %vm66, %v63, 0
    %91 = vmatprep.subr.mxu0 0.0
    %92 = vmatpush1.msra.mxu0 0.0
    %93 = vmatprep.subr.mxu0 0.0
    %94 = vmatpush1.msra.mxu0 0.0
    %95 = vmatprep.subr.mxu0 0.0
    %96 = vmatpush1.msra.mxu0 0.0
    %97 = vmatprep.subr.mxu0 0.0
    %98 = vmatpush1.msra.mxu0 0.0
    %99 = vmatprep.subr.mxu0 0.0
    %100 = vmatpush1.msra.mxu0 0.0
    %101 = vmatprep.subr.mxu0 0.0
    %102 = vmatpush1.msra.mxu0 0.0
    %103 = vmatprep.subr.mxu0 0.0
    %104 = vmatpush1.msra.mxu0 0.0
    %105 = vmatprep.subr.mxu0 0.0
    %106 = vmatpush1.msra.mxu0 0.0
    %107 = vmatprep.subr.mxu0 0.0
    %108 = vmatpush1.msra.mxu0 0.0
    %109 = vmatprep.subr.mxu0 0.0
    %110 = vmatpush1.msra.mxu0 0.0
    %111 = vmatprep.subr.mxu0 0.0
    %112 = vmatpush1.msra.mxu0 0.0
    %113 = vmatprep.subr.mxu0 0.0
    %114 = vmatpush1.msra.mxu0 0.0
    %115 = vmatprep.subr.mxu0 0.0
    %116 = vmatpush1.msra.mxu0 0.0
    %117 = vmatprep.subr.mxu0 0.0
    %118 = vmatpush1.msra.mxu0 0.0
    %119 = vmatprep.subr.mxu0 0.0
    %120 = vmatpush1.msra.mxu0 %v65
    %121 = vmatprep.subr.mxu0 0.0
    %122 = vmatpush1.msra.mxu0 %v64
    %123 = vmatprep.subr.mxu0 0.0
    %124 = vmatpush2.msra.mxu0 0.0
    %125 = vmatprep.subr.mxu0 0.0
    %126 = vmatpush2.msra.mxu0 0.0
    %127 = vmatprep.subr.mxu0 0.0
    %128 = vmatpush2.msra.mxu0 0.0
    %129 = vmatprep.subr.mxu0 0.0
    %130 = vmatpush2.msra.mxu0 0.0
    %131 = vmatprep.subr.mxu0 0.0
    %132 = vmatpush2.msra.mxu0 0.0
    %133 = vmatprep.subr.mxu0 0.0
    %134 = vmatpush2.msra.mxu0 0.0
    %135 = vmatprep.subr.mxu0 0.0
    %136 = vmatpush2.msra.mxu0 0.0
    %137 = vmatprep.subr.mxu0 0.0
    %138 = vmatpush2.msra.mxu0 0.0
    %139 = vmatprep.subr.mxu0 0.0
    %140 = vmatpush2.msra.mxu0 0.0
    %141 = vmatprep.subr.mxu0 0.0
    %142 = vmatpush2.msra.mxu0 0.0
    %143 = vmatprep.subr.mxu0 0.0
    %144 = vmatpush2.msra.mxu0 0.0
    %145 = vmatprep.subr.mxu0 0.0
    %146 = vmatpush2.msra.mxu0 0.0
    %147 = vmatprep.subr.mxu0 0.0
    %148 = vmatpush2.msra.mxu0 0.0
    %149 = vmatprep.subr.mxu0 0.0
    %150 = vmatpush2.msra.mxu0 0.0
    %151 = vmatprep.subr.mxu0 0.0
    %152 = vmatpush2.msra.mxu0 0.0
    %153 = vmatprep.subr.mxu0 0.0
    %154 = vmatpush2.msra.mxu0 0.0
    %155 = vmatprep.mubr.f32.mxu0 0.0
    %156 = vmatmul.mubr.f32.gmra.mxu0 %v68
    %v157 = vpop.f32.mrf.mxu0
    %v158 = vadd.f32 0.0, %v157
    %v159 = vpop.f32.mrf.mxu0
    %160 = vmatprep.mubr.f32.mxu0 0.0
    %161 = vmatmul.mubr.f32.gmra.mxu0 %v71
    %v162 = vpop.f32.mrf.mxu0
    %v163 = vadd.f32 0.0, %v162
    %v164 = vpop.f32.mrf.mxu0
    %165 = vmatprep.mubr.f32.mxu0 0.0
    %166 = vmatmul.mubr.f32.gmra.mxu0 %v74
    %v167 = vpop.f32.mrf.mxu0
    %v168 = vadd.f32 0.0, %v167
    %v169 = vpop.f32.mrf.mxu0
    %170 = vmatprep.mubr.f32.mxu0 0.0
    %171 = vmatmul.mubr.f32.gmra.mxu0 %v77
    %v172 = vpop.f32.mrf.mxu0
    %v173 = vadd.f32 0.0, %v172
    %v174 = vpop.f32.mrf.mxu0
    %175 = vmatprep.mubr.f32.mxu0 0.0
    %176 = vmatmul.mubr.f32.gmra.mxu0 %v80
    %v177 = vpop.f32.mrf.mxu0
    %v178 = vadd.f32 0.0, %v177
    %v179 = vpop.f32.mrf.mxu0
    %180 = vmatprep.mubr.f32.mxu0 0.0
    %181 = vmatmul.mubr.f32.gmra.mxu0 %v83
    %v182 = vpop.f32.mrf.mxu0
    %v183 = vadd.f32 0.0, %v182
    %v184 = vpop.f32.mrf.mxu0
    %185 = vmatprep.mubr.f32.mxu0 0.0
    %186 = vmatmul.mubr.f32.gmra.mxu0 %v86
    %v187 = vpop.f32.mrf.mxu0
    %v188 = vadd.f32 0.0, %v187
    %v189 = vpop.f32.mrf.mxu0
    %190 = vmatprep.mubr.f32.mxu0 0.0
    %191 = vmatmul.mubr.f32.gmra.mxu0 %v89
    %v192 = vpop.f32.mrf.mxu0
    %v193 = vadd.f32 0.0, %v192
    %v194 = vpop.f32.mrf.mxu0
    %195 = vdwg.mxu0
    %vm196 = vcmask 64512
    %197 = vst.msk [vmem:[%s2] sm:$0xff] %vm196, %v158
    %198 = vst.msk [vmem:[%s2 + $0x8] sm:$0xff] %vm196, %v163
    %199 = vst.msk [vmem:[%s2 + $0x10] sm:$0xff] %vm196, %v168
    %200 = vst.msk [vmem:[%s2 + $0x18] sm:$0xff] %vm196, %v173
    %201 = vst.msk [vmem:[%s2 + $0x20] sm:$0xff] %vm196, %v178
    %202 = vst.msk [vmem:[%s2 + $0x28] sm:$0xff] %vm196, %v183
    %203 = vst.msk [vmem:[%s2 + $0x30] sm:$0xff] %vm196, %v188
    %204 = vst.msk [vmem:[%s2 + $0x38] sm:$0xff] %vm196, %v193
    // Predicated region
    $region14: #{tpu_custom_call.1} parent=1 // pred_check
      _
    $region15: #{tpu_custom_call.1} parent=1 // pred_check_branch
      %206 = sbr.rel (0) target = $region17
    $region16: #{tpu_custom_call.1} parent=1 // pred_region
      _
    $region17: #{tpu_custom_call.1} parent=1 // pred_fallthru
      _
    // Predicated region
    $region18: #{tpu_custom_call.1} parent=1 // pred_check
      _
    $region19: #{tpu_custom_call.1} parent=1 // pred_check_branch
      %208 = sbr.rel (0) target = $region21
    $region20: #{tpu_custom_call.1} parent=1 // pred_region
      _
    $region21: #{tpu_custom_call.1} parent=1 // pred_fallthru
      _
    %209 = vsyncpa [#allocation3], 1

</llo_original>
